<compile_context>
chip_gen: v7x
topology: tpu7x:2x2x1
jax: 0.10.0
libtpu: 0.0.40
codegen_flags: <defaults>
</compile_context>

<pallas_src>
import functools

import jax
import jax.numpy as jnp
import numpy as np
from jax.experimental import pallas as pl
from jax.experimental.pallas import tpu as pltpu

# ----------------------------------------------------------------------------
# Module hyper-parameters (from loss_stft.__init__)
# ----------------------------------------------------------------------------
N_FFT = 512
HOP = 256
COMPRESS_C = 0.7
LAMDA_RI = 30.0
LAMDA_MAG = 70.0
EPS = 1e-8
N_BINS = N_FFT // 2 + 1      # 257 onesided bins
N_MAIN = N_BINS - 1          # 256 bins handled inside the kernel
ROW_ALIGN = 16               # bf16 sublane packing: (16, 128) vreg tiles
MAX_TILE_R = 1024            # frame rows per grid step (review: 1024-2048)


def _round_up(x, m):
    return (x + m - 1) // m * m


def _build_basis():
    n = np.arange(N_FFT, dtype=np.float64)
    # sqrt of a *periodic* Hann window (torch.hann_window(512).pow(0.5)).
    window = np.sqrt(0.5 * (1.0 - np.cos(2.0 * np.pi * n / N_FFT)))
    f = np.arange(N_MAIN, dtype=np.float64)
    ang = 2.0 * np.pi * np.outer(n, f) / N_FFT
    cosb = np.cos(ang) * window[:, None]          # real-part basis, bins 0..255
    sinb = -np.sin(ang) * window[:, None]         # imag-part basis, bins 0..255
    basis = np.concatenate([cosb, sinb], axis=1)  # (512, 512); col 256 all-zero
    nyq = window * np.cos(np.pi * n)              # Nyquist (bin 256) real column
    return (basis.astype(np.float32), nyq.astype(np.float32),
            window.astype(np.float32))


_BASIS_NP, _NYQ_NP, _WINDOW_NP = _build_basis()


# ----------------------------------------------------------------------------
# Pallas kernel: one fused windowed-DFT matmul (pred & clean stacked along M)
# + compressed spectral error, per-block lane-dense (1, 256) partial sums.
# ----------------------------------------------------------------------------
def _loss_stft_kernel(frames_ref, basis_ref, out_ref, *,
                      tile_r, c, eps2, lamda_ri, lamda_mag):
    # (2, tile_r, 512) bf16 tile: [pred rows ; clean rows].  Flattening the
    # branch axis into M is a pure layout relabel (tile_r % 16 == 0), so the
    # (512, 512) bf16 RHS is staged into the MXU exactly once per step.
    x = frames_ref[...].reshape(2 * tile_r, N_FFT)
    y = jnp.dot(x, basis_ref[...], preferred_element_type=jnp.float32)

    pr, pi_ = y[:tile_r, :N_MAIN], y[:tile_r, N_MAIN:]
    cr, ci = y[tile_r:, :N_MAIN], y[tile_r:, N_MAIN:]

    # l = 2*log(|X| clamped at eps)  ==  log(max(|X|^2, eps^2))
    lp = jnp.log(jnp.maximum(pr * pr + pi_ * pi_, eps2))
    lc = jnp.log(jnp.maximum(cr * cr + ci * ci, eps2))
    p_mag_c = jnp.exp((0.5 * c) * lp)                    # |X|^c
    c_mag_c = jnp.exp((0.5 * c) * lc)
    p_inv = pl.reciprocal(p_mag_c, approx=True)          # |X|^-c via EUP vrcp
    c_inv = pl.reciprocal(c_mag_c, approx=True)

    d_mag = p_mag_c - c_mag_c
    d_re = pr * p_inv - cr * c_inv
    d_im = pi_ * p_inv - ci * c_inv

    # Per-bin partial sums over the row tile; lamdas applied only to the
    # reduced (1, 256) rows (saves full-size VALU multiplies).
    e_mag = jnp.sum(d_mag * d_mag, axis=0, keepdims=True)
    e_ri = jnp.sum(d_re * d_re + d_im * d_im, axis=0, keepdims=True)
    out_ref[...] = (lamda_mag * e_mag + lamda_ri * e_ri)[None]   # (1, 1, 256)


# ----------------------------------------------------------------------------
# Framing (torch.stft center=True, reflect pad), done once on the stacked
# [pred; clean] signal.  Uses the hop == n_fft/2 structure (no gather).
# ----------------------------------------------------------------------------
def _frame_stacked(x):
    """x: (S, B, T) -> reflect-padded frames (S, B, F, N_FFT) and F."""
    S, B, T = x.shape
    pad = N_FFT // 2
    xp = jnp.pad(x, ((0, 0), (0, 0), (pad, pad)), mode="reflect")
    Tp = T + 2 * pad
    num_frames = (Tp - N_FFT) // HOP + 1
    if Tp % HOP == 0 and 2 * HOP == N_FFT:
        # hop = n_fft/2: adjacent hop-chunks form each frame (no gather).
        hops = xp.reshape(S, B, Tp // HOP, HOP)
        frames = jnp.concatenate([hops[:, :, :-1, :], hops[:, :, 1:, :]],
                                 axis=-1)
    else:
        idx = jnp.arange(num_frames)[:, None] * HOP + jnp.arange(N_FFT)[None, :]
        frames = xp[:, :, idx]
    return frames, num_frames


# ----------------------------------------------------------------------------
# Wrapper: bf16 framing, tile selection, pallas_call, Nyquist bin, mean.
# ----------------------------------------------------------------------------
@jax.jit
def loss_stft_pallas(pred, clean):
    """pred, clean: (B, T) float32 -> scalar loss (float32)."""
    B, T = pred.shape

    # Cast to bf16 once, BEFORE framing (halves wrapper-side HBM traffic).
    x = jnp.stack([pred, clean]).astype(jnp.bfloat16)        # (2, B, T)
    frames, num_frames = _frame_stacked(x)                    # (2, B, F, 512)
    rows = B * num_frames
    frames = frames.reshape(2, rows, N_FFT)

    # Row-tile selection: large tiles amortize the ~0.35us/step pipeline
    # overhead and per-dot MXU weight staging; keep >= 2 (even when possible)
    # grid steps so both v7x TensorCores get work via the parallel axis.
    n_blocks = max(2, -(-rows // MAX_TILE_R))
    if n_blocks % 2 and rows > MAX_TILE_R:
        n_blocks += 1
    tile_r = max(ROW_ALIGN,
                 min(MAX_TILE_R, _round_up(-(-rows // n_blocks), ROW_ALIGN)))
    rows_p = _round_up(rows, tile_r)
    grid = rows_p // tile_r

    # Zero row-padding is exactly neutral in every loss term (d_* == 0).
    frames = jnp.pad(frames, ((0, 0), (0, rows_p - rows), (0, 0)))
    basis = jnp.asarray(_BASIS_NP, jnp.bfloat16)

    kernel = functools.partial(
        _loss_stft_kernel, tile_r=tile_r,
        c=COMPRESS_C, eps2=EPS * EPS,
        lamda_ri=LAMDA_RI, lamda_mag=LAMDA_MAG)

    partials = pl.pallas_call(
        kernel,
        out_shape=jax.ShapeDtypeStruct((grid, 1, N_MAIN), jnp.float32),
        grid=(grid,),
        in_specs=[
            # (optional v5e knob: pipeline_mode=pl.Buffered(3) to hide HBM
            #  jitter; default double-buffering is enough on v6e/v7x)
            pl.BlockSpec((2, tile_r, N_FFT), lambda i: (0, i, 0)),
            pl.BlockSpec((N_FFT, 2 * N_MAIN), lambda i: (0, 0)),
        ],
        out_specs=pl.BlockSpec((1, 1, N_MAIN), lambda i: (i, 0, 0)),
        compiler_params=pltpu.CompilerParams(
            dimension_semantics=("parallel",)),
    )(frames, basis)

    main_sum = jnp.sum(partials)

    # Nyquist bin (index 256): purely real.  Tiny bf16 matvec (f32 accumulate)
    # on the already-built frames -- no f32 frame copies kept live.
    nyq = jnp.asarray(_NYQ_NP, jnp.bfloat16)
    y_ny = jnp.einsum("srn,n->sr", frames, nyq,
                      preferred_element_type=jnp.float32)     # (2, rows_p)
    p_ny, c_ny = y_ny[0], y_ny[1]
    p_mc = jnp.maximum(jnp.abs(p_ny), EPS) ** COMPRESS_C
    c_mc = jnp.maximum(jnp.abs(c_ny), EPS) ** COMPRESS_C
    d_mag = p_mc - c_mc
    d_re = p_ny / p_mc - c_ny / c_mc
    nyq_sum = jnp.sum(LAMDA_MAG * d_mag * d_mag + LAMDA_RI * d_re * d_re)

    count = rows * N_BINS  # true MSE element count: B * 257 * num_frames
    return (main_sum + nyq_sum) / jnp.float32(count)


# ----------------------------------------------------------------------------
# Pure-JAX reference (mirrors torch.stft semantics) for a sanity check
# ----------------------------------------------------------------------------
def loss_stft_ref(pred, clean):
    window = jnp.asarray(_WINDOW_NP, jnp.float32)
    x = jnp.stack([pred, clean]).astype(jnp.float32)
    frames, _ = _frame_stacked(x)                         # (2, B, F, 512) f32
    tf = jnp.fft.rfft(frames * window, axis=-1)           # (2, B, F, 257)
    p_tf, c_tf = tf[0], tf[1]
    p_mag_c = jnp.maximum(jnp.abs(p_tf), EPS) ** COMPRESS_C
    c_mag_c = jnp.maximum(jnp.abs(c_tf), EPS) ** COMPRESS_C
    p_c = p_tf / p_mag_c
    c_c = c_tf / c_mag_c
    loss_mag = jnp.mean((p_mag_c - c_mag_c) ** 2)
    loss_r = jnp.mean((p_c.real - c_c.real) ** 2)
    loss_i = jnp.mean((p_c.imag - c_c.imag) ** 2)
    return LAMDA_MAG * loss_mag + LAMDA_RI * (loss_r + loss_i)


if __name__ == "__main__":
    key = jax.random.PRNGKey(0)
    k1, k2 = jax.random.split(key)
    B, T = 2, 2048  # small (B, T) waveforms; T multiple of hop
    pred = jax.random.normal(k1, (B, T), dtype=jnp.float32)
    clean = jax.random.normal(k2, (B, T), dtype=jnp.float32)

    loss = loss_stft_pallas(pred, clean)
    jax.block_until_ready(loss)

    ref = loss_stft_ref(pred, clean)
    np.testing.assert_allclose(np.asarray(loss), np.asarray(ref),
                               rtol=2e-2, atol=2e-2)
    print("KERNEL_OK")
</pallas_src>

<mosaic_0001>
module attributes {stable_mosaic.version = 11 : i64} {
  func.func @_loss_stft_kernel(%arg0: i32, %arg1: memref<2x16x512xbf16, #tpu.memory_space<vmem>>, %arg2: memref<512x512xbf16, #tpu.memory_space<vmem>>, %arg3: memref<1x1x256xf32, #tpu.memory_space<vmem>>) attributes {dimension_semantics = [#tpu.dimension_semantics<parallel>], iteration_bounds = array<i64: 2>, scalar_prefetch = 0 : i64, scratch_operands = 0 : i64, tpu.core_type = #tpu.core_type<tc>, window_params = [{transform_indices = @transform_0, window_bounds = array<i64: 2, 16, 512>}, {pipeline_mode = #tpu.pipeline_mode<synchronous>, transform_indices = @transform_1, window_bounds = array<i64: 512, 512>}, {transform_indices = @transform_2, window_bounds = array<i64: 1, 1, 256>}]} {
    %c0 = arith.constant 0 : index
    %c0_0 = arith.constant 0 : index
    %c0_1 = arith.constant 0 : index
    %0 = vector.load %arg1[%c0, %c0_0, %c0_1] : memref<2x16x512xbf16, #tpu.memory_space<vmem>>, vector<2x16x512xbf16>
    %1 = vector.shape_cast %0 : vector<2x16x512xbf16> to vector<32x512xbf16>
    %c0_2 = arith.constant 0 : index
    %c0_3 = arith.constant 0 : index
    %2 = vector.load %arg2[%c0_2, %c0_3] : memref<512x512xbf16, #tpu.memory_space<vmem>>, vector<512x512xbf16>
    %cst = arith.constant dense<0.000000e+00> : vector<32x512xf32>
    %3 = tpu.matmul %1, %2, %cst {dimension_numbers = #tpu.dot_dimension_numbers<[1], [0], [0], [1], [0, 0, 1, 1], [], []>} : vector<32x512xbf16>, vector<512x512xbf16>, vector<32x512xf32> -> vector<32x512xf32>
    %4 = vector.extract_strided_slice %3 {offsets = [0, 0], sizes = [16, 256], strides = [1, 1]} : vector<32x512xf32> to vector<16x256xf32>
    %5 = vector.extract_strided_slice %3 {offsets = [0, 256], sizes = [16, 256], strides = [1, 1]} : vector<32x512xf32> to vector<16x256xf32>
    %6 = vector.extract_strided_slice %3 {offsets = [16, 0], sizes = [16, 256], strides = [1, 1]} : vector<32x512xf32> to vector<16x256xf32>
    %7 = vector.extract_strided_slice %3 {offsets = [16, 256], sizes = [16, 256], strides = [1, 1]} : vector<32x512xf32> to vector<16x256xf32>
    %8 = arith.mulf %4, %4 : vector<16x256xf32>
    %9 = arith.mulf %5, %5 : vector<16x256xf32>
    %10 = arith.addf %8, %9 : vector<16x256xf32>
    %cst_4 = arith.constant 1.000000e-16 : f32
    %11 = vector.broadcast %cst_4 : f32 to vector<16x256xf32>
    %12 = arith.maximumf %10, %11 : vector<16x256xf32>
    %13 = math.log %12 : vector<16x256xf32>
    %14 = arith.mulf %6, %6 : vector<16x256xf32>
    %15 = arith.mulf %7, %7 : vector<16x256xf32>
    %16 = arith.addf %14, %15 : vector<16x256xf32>
    %cst_5 = arith.constant 1.000000e-16 : f32
    %17 = vector.broadcast %cst_5 : f32 to vector<16x256xf32>
    %18 = arith.maximumf %16, %17 : vector<16x256xf32>
    %19 = math.log %18 : vector<16x256xf32>
    %cst_6 = arith.constant 3.500000e-01 : f32
    %20 = vector.broadcast %cst_6 : f32 to vector<16x256xf32>
    %21 = arith.mulf %20, %13 : vector<16x256xf32>
    %22 = math.exp %21 : vector<16x256xf32>
    %cst_7 = arith.constant 3.500000e-01 : f32
    %23 = vector.broadcast %cst_7 : f32 to vector<16x256xf32>
    %24 = arith.mulf %23, %19 : vector<16x256xf32>
    %25 = math.exp %24 : vector<16x256xf32>
    %26 = tpu.reciprocal %22 {approx = true} : vector<16x256xf32> -> vector<16x256xf32>
    %27 = tpu.reciprocal %25 {approx = true} : vector<16x256xf32> -> vector<16x256xf32>
    %28 = arith.subf %22, %25 : vector<16x256xf32>
    %29 = arith.mulf %4, %26 : vector<16x256xf32>
    %30 = arith.mulf %6, %27 : vector<16x256xf32>
    %31 = arith.subf %29, %30 : vector<16x256xf32>
    %32 = arith.mulf %5, %26 : vector<16x256xf32>
    %33 = arith.mulf %7, %27 : vector<16x256xf32>
    %34 = arith.subf %32, %33 : vector<16x256xf32>
    %35 = arith.mulf %28, %28 : vector<16x256xf32>
    %cst_8 = arith.constant dense<0.000000e+00> : vector<256xf32>
    %36 = vector.multi_reduction <add>, %35, %cst_8 [0] : vector<16x256xf32> to vector<256xf32>
    %37 = vector.shape_cast %36 : vector<256xf32> to vector<1x256xf32>
    %38 = arith.mulf %31, %31 : vector<16x256xf32>
    %39 = arith.mulf %34, %34 : vector<16x256xf32>
    %40 = arith.addf %38, %39 : vector<16x256xf32>
    %cst_9 = arith.constant dense<0.000000e+00> : vector<256xf32>
    %41 = vector.multi_reduction <add>, %40, %cst_9 [0] : vector<16x256xf32> to vector<256xf32>
    %42 = vector.shape_cast %41 : vector<256xf32> to vector<1x256xf32>
    %cst_10 = arith.constant 7.000000e+01 : f32
    %43 = vector.broadcast %cst_10 : f32 to vector<1x256xf32>
    %44 = arith.mulf %43, %37 : vector<1x256xf32>
    %cst_11 = arith.constant 3.000000e+01 : f32
    %45 = vector.broadcast %cst_11 : f32 to vector<1x256xf32>
    %46 = arith.mulf %45, %42 : vector<1x256xf32>
    %47 = arith.addf %44, %46 : vector<1x256xf32>
    %48 = vector.shape_cast %47 : vector<1x256xf32> to vector<1x1x256xf32>
    %c0_12 = arith.constant 0 : index
    %c0_13 = arith.constant 0 : index
    %c0_14 = arith.constant 0 : index
    %49 = vector.load %arg3[%c0_12, %c0_13, %c0_14] : memref<1x1x256xf32, #tpu.memory_space<vmem>>, vector<1x1x256xf32>
    tpu.vector_store %arg3[%c0_12, %c0_13, %c0_14], %48 {strides = array<i32>} : memref<1x1x256xf32, #tpu.memory_space<vmem>>, vector<1x1x256xf32>,
    return
  }
  func.func @transform_0(%arg0: i32) -> (i32, i32, i32) {
    %c0_i32 = arith.constant 0 : i32
    %c0_i32_0 = arith.constant 0 : i32
    %c0_i32_1 = arith.constant 0 : i32
    return %c0_i32, %arg0, %c0_i32_0 : i32, i32, i32
  }
  func.func @transform_1(%arg0: i32) -> (i32, i32) {
    %c0_i32 = arith.constant 0 : i32
    %c0_i32_0 = arith.constant 0 : i32
    %c0_i32_1 = arith.constant 0 : i32
    return %c0_i32, %c0_i32_0 : i32, i32
  }
  func.func @transform_2(%arg0: i32) -> (i32, i32, i32) {
    %c0_i32 = arith.constant 0 : i32
    %c0_i32_0 = arith.constant 0 : i32
    %c0_i32_1 = arith.constant 0 : i32
    return %arg0, %c0_i32, %c0_i32_0 : i32, i32, i32
  }
}

</mosaic_0001>

<llo_original>
// kernel: loss_stft_pallas.1
$region0: #{loss_stft_pallas.1}
  #allocation0 [shape = 'u32[]', space=smem, size = 0x4, offset = 0x4, fixed_abs, tag = 'smem constant byte address 0x4 - core index']
  #allocation1 [shape = 'u32[144,128]{1,0:T(1,128)}', space=vmem, size = 0x12000, scoped, tag = 'internal scratch']
  %s0 = inlined_call_operand.vmem [shape: bf16[2,32,512], index: 0, kind: input, shape index: {}]
  %s1 = inlined_call_operand.vmem [shape: bf16[512,512], index: 1, kind: input, shape index: {}]
  %s2 = inlined_call_operand.vmem [shape: f32[2,1,256], index: 2, kind: output, shape index: {}]
  %s3 = sld [smem:[#allocation0]]
  $region64: #{loss_stft_pallas.1} parent=0
    _
  %s5 = ssub.s32 1, %s3
  %s6 = scalar_select 0, %s5, %s3
  $region1: #{loss_stft_pallas.1} parent=0
    #allocation2 [shape = 'u8[65536]{0}', space=vmem, size = 0x10000, scoped, tag = 'input window, operand 0']
    loop: start=0, step=1, limit=4
    $region2: #{loss_stft_pallas.1} parent=1 // loop_pre_header
      _
    $region3: #{loss_stft_pallas.1} parent=1 // loop_header
      %s8 = sphi 0, %s12
      %p9 = scmp.ge.s32.totalorder %s8, 4
      %s18 = sphi 0, %s20
      %s21 = sphi 0, %s18
      %s22 = sphi 0, %s21
      %s38 = sphi 0, %s22
      %s42 = sphi 0, %s42
      %s44 = sphi 0, %s42
      %s45 = sphi 0, %s44
      %s59 = sphi 0, %s45
      %s65 = sphi 0, %s67
      %s68 = sphi 0, %s65
      %s69 = sphi 0, %s68
      %s85 = sphi 0, %s69
    $region4: #{loss_stft_pallas.1} parent=1 // loop_header_branch
      %11 = sbr.rel (%p9) target = $region8
    $region5: #{loss_stft_pallas.1} parent=1 // loop_body
      %s13 = ssub.s32 %s8, 1
      %s14 = ssub.s32 %s8, 2
      %s15 = sadd.s32 %s8, 1
      %s16 = ssub.s32 %s8, %s15
      %p17 = scmp.eq.s32.totalorder %s16, 0
      %s19 = sadd.s32 %s18, 1
      %s20 = scalar_select %p17, %s18, %s19
      %p23 = pneg %p17
      %p24 = scmp.eq.s32.totalorder %s8, 1
      %p25 = por %p23, %p24
      %p26 = scmp.ne.s32.totalorder %s18, %s21
      %p27 = scmp.eq.s32.totalorder %s8, 0
      %p28 = por %p26, %p27
      %p29 = scmp.ne.s32.totalorder %s18, %s21
      %p30 = scmp.eq.s32.totalorder %s13, 1
      %p31 = por %p29, %p30
      %p32 = scmp.ne.s32.totalorder %s21, %s22
      %p33 = scmp.eq.s32.totalorder %s13, 0
      %p34 = por %p32, %p33
      %p35 = scmp.ne.s32.totalorder %s21, %s22
      %p36 = scmp.eq.s32.totalorder %s14, 1
      %p37 = por %p35, %p36
      %p39 = scmp.ne.s32.totalorder %s22, %s38
      %p40 = scmp.eq.s32.totalorder %s14, 0
      %p41 = por %p39, %p40
      %s43 = sadd.s32 %s42, 1
      %p46 = scmp.eq.s32.totalorder %s8, 1
      %p47 = scmp.ne.s32.totalorder %s42, %s44
      %p48 = scmp.eq.s32.totalorder %s8, 0
      %p49 = por %p47, %p48
      %p50 = scmp.ne.s32.totalorder %s42, %s44
      %p51 = scmp.eq.s32.totalorder %s13, 1
      %p52 = por %p50, %p51
      %p53 = scmp.ne.s32.totalorder %s44, %s45
      %p54 = scmp.eq.s32.totalorder %s13, 0
      %p55 = por %p53, %p54
      %p56 = scmp.ne.s32.totalorder %s44, %s45
      %p57 = scmp.eq.s32.totalorder %s14, 1
      %p58 = por %p56, %p57
      %p60 = scmp.ne.s32.totalorder %s45, %s59
      %p61 = scmp.eq.s32.totalorder %s14, 0
      %p62 = por %p60, %p61
      %s63 = ssub.s32 %s8, %s15
      %p64 = scmp.eq.s32.totalorder %s63, 0
      %s66 = sadd.s32 %s65, 1
      %s67 = scalar_select %p64, %s65, %s66
      %p70 = pneg %p64
      %p71 = scmp.eq.s32.totalorder %s8, 1
      %p72 = por %p70, %p71
      %p73 = scmp.ne.s32.totalorder %s65, %s68
      %p74 = scmp.eq.s32.totalorder %s8, 0
      %p75 = por %p73, %p74
      %p76 = scmp.ne.s32.totalorder %s65, %s68
      %p77 = scmp.eq.s32.totalorder %s13, 1
      %p78 = por %p76, %p77
      %p79 = scmp.ne.s32.totalorder %s68, %s69
      %p80 = scmp.eq.s32.totalorder %s13, 0
      %p81 = por %p79, %p80
      %p82 = scmp.ne.s32.totalorder %s68, %s69
      %p83 = scmp.eq.s32.totalorder %s14, 1
      %p84 = por %p82, %p83
      %p86 = scmp.ne.s32.totalorder %s69, %s85
      %p87 = scmp.eq.s32.totalorder %s14, 0
      %p88 = por %p86, %p87
      %p89 = scmp.le.s32.totalorder 1, %s8
      %p90 = scmp.lt.s32.totalorder %s8, 3
      %p91 = pnand %p89, %p90
      %p92 = pneg %p91
      // Predicated region
      $region9: #{loss_stft_pallas.1} parent=5 // pred_check
        _
      $region10: #{loss_stft_pallas.1} parent=5 // pred_check_branch
        %94 = sbr.rel (%p91) target = $region12
      $region11: #{loss_stft_pallas.1} parent=5 // pred_region
        %s95 = ssub.s32 %s8, 1
        // Predicated region
        $region13: #{loss_stft_pallas.1} parent=11 // pred_check
          %p96 = pneg %p55
        $region14: #{loss_stft_pallas.1} parent=11 // pred_check_branch
          %98 = sbr.rel (%p96) target = $region16
        $region15: #{loss_stft_pallas.1} parent=11 // pred_region
          _
        $region16: #{loss_stft_pallas.1} parent=11 // pred_fallthru
          _
      $region12: #{loss_stft_pallas.1} parent=5 // pred_fallthru
        _
      %p99 = scmp.lt.s32.totalorder %s8, 2
      // Predicated region
      $region17: #{loss_stft_pallas.1} parent=5 // pred_check
        %p100 = pneg %p99
      $region18: #{loss_stft_pallas.1} parent=5 // pred_check_branch
        %102 = sbr.rel (%p100) target = $region20
      $region19: #{loss_stft_pallas.1} parent=5 // pred_region
        // Predicated region
        $region21: #{loss_stft_pallas.1} parent=19 // pred_check
          %p103 = pneg %p28
        $region22: #{loss_stft_pallas.1} parent=19 // pred_check_branch
          %105 = sbr.rel (%p103) target = $region24
        $region23: #{loss_stft_pallas.1} parent=19 // pred_region
          %s106 = sand.u32 %s18, 1
          %s107 = sand.u32 %s18, 1
          %s108 = smul.addr %s107, 64
          %s109 = scalar_lea.vmem [#allocation2], %s108
          %s110 = smul.u32 2, %s8
          %s111 = smul.addr %s110, 4
          %s112 = smul.addr %s111, 4
          %s113 = scalar_lea.vmem %s0, %s112
          // Predicated region
          $region25: #{loss_stft_pallas.1} parent=23 // pred_check
            _
          $region26: #{loss_stft_pallas.1} parent=23 // pred_check_branch
            %115 = sbr.rel (0) target = $region28
          $region27: #{loss_stft_pallas.1} parent=23 // pred_region
            // Predicated region
            $region29: #{loss_stft_pallas.1} parent=27 // pred_check
              _
            $region30: #{loss_stft_pallas.1} parent=27 // pred_check_branch
              %117 = sbr.rel (0) target = $region32
            $region31: #{loss_stft_pallas.1} parent=27 // pred_region
              loop: start=0, step=1, limit=1
              $region33: #{loss_stft_pallas.1} parent=31 // loop_pre_header
                _
              $region34: #{loss_stft_pallas.1} parent=31 // loop_header
                %s119 = sphi 0, %s123
                %p120 = scmp.ge.s32.totalorder %s119, 1
                %s124 = sphi %s113, %s113
                %s125 = sphi %s109, %s109
              $region35: #{loss_stft_pallas.1} parent=31 // loop_header_branch
                %122 = sbr.rel (%p120) target = $region39
              $region36: #{loss_stft_pallas.1} parent=31 // loop_body
                %v126 = vld [vmem:[%s124] sm:$0xff]
                %127 = vst [vmem:[%s125] sm:$0xff] %v126
                %v128 = vld [vmem:[%s124 + $0x8] sm:$0xff]
                %129 = vst [vmem:[%s125 + $0x8] sm:$0xff] %v128
                %v130 = vld [vmem:[%s124 + $0x10] sm:$0xff]
                %131 = vst [vmem:[%s125 + $0x10] sm:$0xff] %v130
                %v132 = vld [vmem:[%s124 + $0x18] sm:$0xff]
                %133 = vst [vmem:[%s125 + $0x18] sm:$0xff] %v132
                %v134 = vld [vmem:[%s124 + $0x40] sm:$0xff]
                %135 = vst [vmem:[%s125 + $0x20] sm:$0xff] %v134
                %v136 = vld [vmem:[%s124 + $0x48] sm:$0xff]
                %137 = vst [vmem:[%s125 + $0x28] sm:$0xff] %v136
                %v138 = vld [vmem:[%s124 + $0x50] sm:$0xff]
                %139 = vst [vmem:[%s125 + $0x30] sm:$0xff] %v138
                %v140 = vld [vmem:[%s124 + $0x58] sm:$0xff]
                %141 = vst [vmem:[%s125 + $0x38] sm:$0xff] %v140
              $region37: #{loss_stft_pallas.1} parent=31 // loop_footer
                %s123 = sadd.s32 1, %s119
              $region38: #{loss_stft_pallas.1} parent=31 // loop_footer_branch
                %118 = sbr.rel target = $region34
              $region39: #{loss_stft_pallas.1} parent=31 // loop_exit
                _
            $region32: #{loss_stft_pallas.1} parent=27 // pred_fallthru
              _
            // Predicated region
            $region40: #{loss_stft_pallas.1} parent=27 // pred_check
              _
            $region41: #{loss_stft_pallas.1} parent=27 // pred_check_branch
              %143 = sbr.rel target = $region43
            $region42: #{loss_stft_pallas.1} parent=27 // pred_region
              _
            $region43: #{loss_stft_pallas.1} parent=27 // pred_fallthru
              _
          $region28: #{loss_stft_pallas.1} parent=23 // pred_fallthru
            _
          %144 = vnop
        $region24: #{loss_stft_pallas.1} parent=19 // pred_fallthru
          _
      $region20: #{loss_stft_pallas.1} parent=5 // pred_fallthru
        _
      %p145 = scmp.le.s32.totalorder 1, %s8
      %p146 = scmp.lt.s32.totalorder %s8, 3
      %p147 = pnand %p145, %p146
      %p148 = pneg %p147
      // Predicated region
      $region44: #{loss_stft_pallas.1} parent=5 // pred_check
        _
      $region45: #{loss_stft_pallas.1} parent=5 // pred_check_branch
        %150 = sbr.rel (%p147) target = $region47
      $region46: #{loss_stft_pallas.1} parent=5 // pred_region
        %s151 = ssub.s32 %s8, 1
        %s152 = sand.u32 %s21, 1
        %s153 = sand.u32 %s21, 1
        %s154 = smul.addr %s153, 64
        %s155 = scalar_lea.vmem [#allocation2], %s154
        // Predicated region
        $region48: #{loss_stft_pallas.1} parent=46 // pred_check
          %p156 = pneg %p34
        $region49: #{loss_stft_pallas.1} parent=46 // pred_check_branch
          %158 = sbr.rel (%p156) target = $region51
        $region50: #{loss_stft_pallas.1} parent=46 // pred_region
          _
        $region51: #{loss_stft_pallas.1} parent=46 // pred_fallthru
          _
        %s159 = sand.u32 %s21, 1
        %s160 = sand.u32 %s21, 1
        %s161 = smul.addr %s160, 64
        %s162 = scalar_lea.vmem [#allocation2], %s161
        %p163 = pneg %p34
        %p164 = pneg %p31
        %p165 = pneg %p55
        %p166 = pneg %p52
        %p167 = pneg %p81
        %p168 = pneg %p78
        %p169 = scmp.lt.s32.totalorder %s13, 1
        %s170 = scalar_select %p169, %s13, 1
        %s171 = smul.addr %s170, 2
        %s172 = scalar_lea.vmem %s2, %s171
        %s173 = smul.u32 2, %s13
        %p174 = scmp.lt.s32.totalorder %s13, 1
        %s175 = scalar_select %p174, %s13, 1
        %s176 = smul.addr %s175, 2
        %s177 = scalar_lea.vmem %s2, %s176
        %v178 = vld [vmem:[%s155] sm:$0xff]
        %v179 = vld [vmem:[%s155 + $0x8] sm:$0xff]
        %v180 = vld [vmem:[%s155 + $0x10] sm:$0xff]
        %v181 = vld [vmem:[%s155 + $0x18] sm:$0xff]
        %v182 = vld [vmem:[%s155 + $0x20] sm:$0xff]
        %v183 = vld [vmem:[%s155 + $0x28] sm:$0xff]
        %v184 = vld [vmem:[%s155 + $0x30] sm:$0xff]
        %v185 = vld [vmem:[%s155 + $0x38] sm:$0xff]
        %v186 = vld [vmem:[%s1] sm:$0xff]
        %v187 = vld [vmem:[%s1 + $0x8] sm:$0xff]
        %v188 = vld [vmem:[%s1 + $0x10] sm:$0xff]
        %v189 = vld [vmem:[%s1 + $0x18] sm:$0xff]
        %v190 = vld [vmem:[%s1 + $0x20] sm:$0xff]
        %v191 = vld [vmem:[%s1 + $0x28] sm:$0xff]
        %v192 = vld [vmem:[%s1 + $0x30] sm:$0xff]
        %v193 = vld [vmem:[%s1 + $0x38] sm:$0xff]
        %v194 = vld [vmem:[%s1 + $0x40] sm:$0xff]
        %v195 = vld [vmem:[%s1 + $0x48] sm:$0xff]
        %v196 = vld [vmem:[%s1 + $0x50] sm:$0xff]
        %v197 = vld [vmem:[%s1 + $0x58] sm:$0xff]
        %v198 = vld [vmem:[%s1 + $0x60] sm:$0xff]
        %v199 = vld [vmem:[%s1 + $0x68] sm:$0xff]
        %v200 = vld [vmem:[%s1 + $0x70] sm:$0xff]
        %v201 = vld [vmem:[%s1 + $0x78] sm:$0xff]
        %v202 = vld [vmem:[%s1 + $0x80] sm:$0xff]
        %v203 = vld [vmem:[%s1 + $0x88] sm:$0xff]
        %v204 = vld [vmem:[%s1 + $0x90] sm:$0xff]
        %v205 = vld [vmem:[%s1 + $0x98] sm:$0xff]
        %v206 = vld [vmem:[%s1 + $0xa0] sm:$0xff]
        %v207 = vld [vmem:[%s1 + $0xa8] sm:$0xff]
        %v208 = vld [vmem:[%s1 + $0xb0] sm:$0xff]
        %v209 = vld [vmem:[%s1 + $0xb8] sm:$0xff]
        %v210 = vld [vmem:[%s1 + $0xc0] sm:$0xff]
        %v211 = vld [vmem:[%s1 + $0xc8] sm:$0xff]
        %v212 = vld [vmem:[%s1 + $0xd0] sm:$0xff]
        %v213 = vld [vmem:[%s1 + $0xd8] sm:$0xff]
        %v214 = vld [vmem:[%s1 + $0xe0] sm:$0xff]
        %v215 = vld [vmem:[%s1 + $0xe8] sm:$0xff]
        %v216 = vld [vmem:[%s1 + $0xf0] sm:$0xff]
        %v217 = vld [vmem:[%s1 + $0xf8] sm:$0xff]
        %v218 = vld [vmem:[%s1 + $0x100] sm:$0xff]
        %v219 = vld [vmem:[%s1 + $0x108] sm:$0xff]
        %v220 = vld [vmem:[%s1 + $0x110] sm:$0xff]
        %v221 = vld [vmem:[%s1 + $0x118] sm:$0xff]
        %v222 = vld [vmem:[%s1 + $0x120] sm:$0xff]
        %v223 = vld [vmem:[%s1 + $0x128] sm:$0xff]
        %v224 = vld [vmem:[%s1 + $0x130] sm:$0xff]
        %v225 = vld [vmem:[%s1 + $0x138] sm:$0xff]
        %v226 = vld [vmem:[%s1 + $0x140] sm:$0xff]
        %v227 = vld [vmem:[%s1 + $0x148] sm:$0xff]
        %v228 = vld [vmem:[%s1 + $0x150] sm:$0xff]
        %v229 = vld [vmem:[%s1 + $0x158] sm:$0xff]
        %v230 = vld [vmem:[%s1 + $0x160] sm:$0xff]
        %v231 = vld [vmem:[%s1 + $0x168] sm:$0xff]
        %v232 = vld [vmem:[%s1 + $0x170] sm:$0xff]
        %v233 = vld [vmem:[%s1 + $0x178] sm:$0xff]
        %v234 = vld [vmem:[%s1 + $0x180] sm:$0xff]
        %v235 = vld [vmem:[%s1 + $0x188] sm:$0xff]
        %v236 = vld [vmem:[%s1 + $0x190] sm:$0xff]
        %v237 = vld [vmem:[%s1 + $0x198] sm:$0xff]
        %v238 = vld [vmem:[%s1 + $0x1a0] sm:$0xff]
        %v239 = vld [vmem:[%s1 + $0x1a8] sm:$0xff]
        %v240 = vld [vmem:[%s1 + $0x1b0] sm:$0xff]
        %v241 = vld [vmem:[%s1 + $0x1b8] sm:$0xff]
        %v242 = vld [vmem:[%s1 + $0x1c0] sm:$0xff]
        %v243 = vld [vmem:[%s1 + $0x1c8] sm:$0xff]
        %v244 = vld [vmem:[%s1 + $0x1d0] sm:$0xff]
        %v245 = vld [vmem:[%s1 + $0x1d8] sm:$0xff]
        %v246 = vld [vmem:[%s1 + $0x1e0] sm:$0xff]
        %v247 = vld [vmem:[%s1 + $0x1e8] sm:$0xff]
        %v248 = vld [vmem:[%s1 + $0x1f0] sm:$0xff]
        %v249 = vld [vmem:[%s1 + $0x1f8] sm:$0xff]
        %v250 = vld [vmem:[%s1 + $0x200] sm:$0xff]
        %v251 = vld [vmem:[%s1 + $0x208] sm:$0xff]
        %v252 = vld [vmem:[%s1 + $0x210] sm:$0xff]
        %v253 = vld [vmem:[%s1 + $0x218] sm:$0xff]
        %v254 = vld [vmem:[%s1 + $0x220] sm:$0xff]
        %v255 = vld [vmem:[%s1 + $0x228] sm:$0xff]
        %v256 = vld [vmem:[%s1 + $0x230] sm:$0xff]
        %v257 = vld [vmem:[%s1 + $0x238] sm:$0xff]
        %v258 = vld [vmem:[%s1 + $0x240] sm:$0xff]
        %v259 = vld [vmem:[%s1 + $0x248] sm:$0xff]
        %v260 = vld [vmem:[%s1 + $0x250] sm:$0xff]
        %v261 = vld [vmem:[%s1 + $0x258] sm:$0xff]
        %v262 = vld [vmem:[%s1 + $0x260] sm:$0xff]
        %v263 = vld [vmem:[%s1 + $0x268] sm:$0xff]
        %v264 = vld [vmem:[%s1 + $0x270] sm:$0xff]
        %v265 = vld [vmem:[%s1 + $0x278] sm:$0xff]
        %v266 = vld [vmem:[%s1 + $0x280] sm:$0xff]
        %v267 = vld [vmem:[%s1 + $0x288] sm:$0xff]
        %v268 = vld [vmem:[%s1 + $0x290] sm:$0xff]
        %v269 = vld [vmem:[%s1 + $0x298] sm:$0xff]
        %v270 = vld [vmem:[%s1 + $0x2a0] sm:$0xff]
        %v271 = vld [vmem:[%s1 + $0x2a8] sm:$0xff]
        %v272 = vld [vmem:[%s1 + $0x2b0] sm:$0xff]
        %v273 = vld [vmem:[%s1 + $0x2b8] sm:$0xff]
        %v274 = vld [vmem:[%s1 + $0x2c0] sm:$0xff]
        %v275 = vld [vmem:[%s1 + $0x2c8] sm:$0xff]
        %v276 = vld [vmem:[%s1 + $0x2d0] sm:$0xff]
        %v277 = vld [vmem:[%s1 + $0x2d8] sm:$0xff]
        %v278 = vld [vmem:[%s1 + $0x2e0] sm:$0xff]
        %v279 = vld [vmem:[%s1 + $0x2e8] sm:$0xff]
        %v280 = vld [vmem:[%s1 + $0x2f0] sm:$0xff]
        %v281 = vld [vmem:[%s1 + $0x2f8] sm:$0xff]
        %v282 = vld [vmem:[%s1 + $0x300] sm:$0xff]
        %v283 = vld [vmem:[%s1 + $0x308] sm:$0xff]
        %v284 = vld [vmem:[%s1 + $0x310] sm:$0xff]
        %v285 = vld [vmem:[%s1 + $0x318] sm:$0xff]
        %v286 = vld [vmem:[%s1 + $0x320] sm:$0xff]
        %v287 = vld [vmem:[%s1 + $0x328] sm:$0xff]
        %v288 = vld [vmem:[%s1 + $0x330] sm:$0xff]
        %v289 = vld [vmem:[%s1 + $0x338] sm:$0xff]
        %v290 = vld [vmem:[%s1 + $0x340] sm:$0xff]
        %v291 = vld [vmem:[%s1 + $0x348] sm:$0xff]
        %v292 = vld [vmem:[%s1 + $0x350] sm:$0xff]
        %v293 = vld [vmem:[%s1 + $0x358] sm:$0xff]
        %v294 = vld [vmem:[%s1 + $0x360] sm:$0xff]
        %v295 = vld [vmem:[%s1 + $0x368] sm:$0xff]
        %v296 = vld [vmem:[%s1 + $0x370] sm:$0xff]
        %v297 = vld [vmem:[%s1 + $0x378] sm:$0xff]
        %v298 = vld [vmem:[%s1 + $0x380] sm:$0xff]
        %v299 = vld [vmem:[%s1 + $0x388] sm:$0xff]
        %v300 = vld [vmem:[%s1 + $0x390] sm:$0xff]
        %v301 = vld [vmem:[%s1 + $0x398] sm:$0xff]
        %v302 = vld [vmem:[%s1 + $0x3a0] sm:$0xff]
        %v303 = vld [vmem:[%s1 + $0x3a8] sm:$0xff]
        %v304 = vld [vmem:[%s1 + $0x3b0] sm:$0xff]
        %v305 = vld [vmem:[%s1 + $0x3b8] sm:$0xff]
        %v306 = vld [vmem:[%s1 + $0x3c0] sm:$0xff]
        %v307 = vld [vmem:[%s1 + $0x3c8] sm:$0xff]
        %v308 = vld [vmem:[%s1 + $0x3d0] sm:$0xff]
        %v309 = vld [vmem:[%s1 + $0x3d8] sm:$0xff]
        %v310 = vld [vmem:[%s1 + $0x3e0] sm:$0xff]
        %v311 = vld [vmem:[%s1 + $0x3e8] sm:$0xff]
        %v312 = vld [vmem:[%s1 + $0x3f0] sm:$0xff]
        %v313 = vld [vmem:[%s1 + $0x3f8] sm:$0xff]
        %v322 = vunpack.c.l.b16 %v178
        %v323 = vunpack.c.h.b16 %v178
        %v324 = vunpack.c.l.b16 %v179
        %v325 = vunpack.c.h.b16 %v179
        %v326 = vunpack.c.l.b16 %v180
        %v327 = vunpack.c.h.b16 %v180
        %v328 = vunpack.c.l.b16 %v181
        %v329 = vunpack.c.h.b16 %v181
        %v330 = vunpack.c.l.b16 %v182
        %v331 = vunpack.c.h.b16 %v182
        %v332 = vunpack.c.l.b16 %v183
        %v333 = vunpack.c.h.b16 %v183
        %v334 = vunpack.c.l.b16 %v184
        %v335 = vunpack.c.h.b16 %v184
        %v336 = vunpack.c.l.b16 %v185
        %v337 = vunpack.c.h.b16 %v185
        %v338 = vpack.c.b16 %v326, %v322
        %v339 = vpack.c.b16 %v327, %v323
        %v340 = vpack.c.b16 %v328, %v324
        %v341 = vpack.c.b16 %v329, %v325
        %v342 = vpack.c.b16 %v334, %v330
        %v343 = vpack.c.b16 %v335, %v331
        %v344 = vpack.c.b16 %v336, %v332
        %v345 = vpack.c.b16 %v337, %v333
        %v482 = vunpack.c.l.b16 %v186
        %v483 = vunpack.c.h.b16 %v186
        %v484 = vunpack.c.l.b16 %v187
        %v485 = vunpack.c.h.b16 %v187
        %v486 = vunpack.c.l.b16 %v188
        %v487 = vunpack.c.h.b16 %v188
        %v488 = vunpack.c.l.b16 %v189
        %v489 = vunpack.c.h.b16 %v189
        %v490 = vunpack.c.l.b16 %v190
        %v491 = vunpack.c.h.b16 %v190
        %v492 = vunpack.c.l.b16 %v191
        %v493 = vunpack.c.h.b16 %v191
        %v494 = vunpack.c.l.b16 %v192
        %v495 = vunpack.c.h.b16 %v192
        %v496 = vunpack.c.l.b16 %v193
        %v497 = vunpack.c.h.b16 %v193
        %v498 = vunpack.c.l.b16 %v194
        %v499 = vunpack.c.h.b16 %v194
        %v500 = vunpack.c.l.b16 %v195
        %v501 = vunpack.c.h.b16 %v195
        %v502 = vunpack.c.l.b16 %v196
        %v503 = vunpack.c.h.b16 %v196
        %v504 = vunpack.c.l.b16 %v197
        %v505 = vunpack.c.h.b16 %v197
        %v506 = vunpack.c.l.b16 %v198
        %v507 = vunpack.c.h.b16 %v198
        %v508 = vunpack.c.l.b16 %v199
        %v509 = vunpack.c.h.b16 %v199
        %v510 = vunpack.c.l.b16 %v200
        %v511 = vunpack.c.h.b16 %v200
        %v512 = vunpack.c.l.b16 %v201
        %v513 = vunpack.c.h.b16 %v201
        %v514 = vunpack.c.l.b16 %v202
        %v515 = vunpack.c.h.b16 %v202
        %v516 = vunpack.c.l.b16 %v203
        %v517 = vunpack.c.h.b16 %v203
        %v518 = vunpack.c.l.b16 %v204
        %v519 = vunpack.c.h.b16 %v204
        %v520 = vunpack.c.l.b16 %v205
        %v521 = vunpack.c.h.b16 %v205
        %v522 = vunpack.c.l.b16 %v206
        %v523 = vunpack.c.h.b16 %v206
        %v524 = vunpack.c.l.b16 %v207
        %v525 = vunpack.c.h.b16 %v207
        %v526 = vunpack.c.l.b16 %v208
        %v527 = vunpack.c.h.b16 %v208
        %v528 = vunpack.c.l.b16 %v209
        %v529 = vunpack.c.h.b16 %v209
        %v530 = vunpack.c.l.b16 %v210
        %v531 = vunpack.c.h.b16 %v210
        %v532 = vunpack.c.l.b16 %v211
        %v533 = vunpack.c.h.b16 %v211
        %v534 = vunpack.c.l.b16 %v212
        %v535 = vunpack.c.h.b16 %v212
        %v536 = vunpack.c.l.b16 %v213
        %v537 = vunpack.c.h.b16 %v213
        %v538 = vunpack.c.l.b16 %v214
        %v539 = vunpack.c.h.b16 %v214
        %v540 = vunpack.c.l.b16 %v215
        %v541 = vunpack.c.h.b16 %v215
        %v542 = vunpack.c.l.b16 %v216
        %v543 = vunpack.c.h.b16 %v216
        %v544 = vunpack.c.l.b16 %v217
        %v545 = vunpack.c.h.b16 %v217
        %v546 = vunpack.c.l.b16 %v218
        %v547 = vunpack.c.h.b16 %v218
        %v548 = vunpack.c.l.b16 %v219
        %v549 = vunpack.c.h.b16 %v219
        %v550 = vunpack.c.l.b16 %v220
        %v551 = vunpack.c.h.b16 %v220
        %v552 = vunpack.c.l.b16 %v221
        %v553 = vunpack.c.h.b16 %v221
        %v554 = vunpack.c.l.b16 %v222
        %v555 = vunpack.c.h.b16 %v222
        %v556 = vunpack.c.l.b16 %v223
        %v557 = vunpack.c.h.b16 %v223
        %v558 = vunpack.c.l.b16 %v224
        %v559 = vunpack.c.h.b16 %v224
        %v560 = vunpack.c.l.b16 %v225
        %v561 = vunpack.c.h.b16 %v225
        %v562 = vunpack.c.l.b16 %v226
        %v563 = vunpack.c.h.b16 %v226
        %v564 = vunpack.c.l.b16 %v227
        %v565 = vunpack.c.h.b16 %v227
        %v566 = vunpack.c.l.b16 %v228
        %v567 = vunpack.c.h.b16 %v228
        %v568 = vunpack.c.l.b16 %v229
        %v569 = vunpack.c.h.b16 %v229
        %v570 = vunpack.c.l.b16 %v230
        %v571 = vunpack.c.h.b16 %v230
        %v572 = vunpack.c.l.b16 %v231
        %v573 = vunpack.c.h.b16 %v231
        %v574 = vunpack.c.l.b16 %v232
        %v575 = vunpack.c.h.b16 %v232
        %v576 = vunpack.c.l.b16 %v233
        %v577 = vunpack.c.h.b16 %v233
        %v578 = vunpack.c.l.b16 %v234
        %v579 = vunpack.c.h.b16 %v234
        %v580 = vunpack.c.l.b16 %v235
        %v581 = vunpack.c.h.b16 %v235
        %v582 = vunpack.c.l.b16 %v236
        %v583 = vunpack.c.h.b16 %v236
        %v584 = vunpack.c.l.b16 %v237
        %v585 = vunpack.c.h.b16 %v237
        %v586 = vunpack.c.l.b16 %v238
        %v587 = vunpack.c.h.b16 %v238
        %v588 = vunpack.c.l.b16 %v239
        %v589 = vunpack.c.h.b16 %v239
        %v590 = vunpack.c.l.b16 %v240
        %v591 = vunpack.c.h.b16 %v240
        %v592 = vunpack.c.l.b16 %v241
        %v593 = vunpack.c.h.b16 %v241
        %v594 = vunpack.c.l.b16 %v242
        %v595 = vunpack.c.h.b16 %v242
        %v596 = vunpack.c.l.b16 %v243
        %v597 = vunpack.c.h.b16 %v243
        %v598 = vunpack.c.l.b16 %v244
        %v599 = vunpack.c.h.b16 %v244
        %v600 = vunpack.c.l.b16 %v245
        %v601 = vunpack.c.h.b16 %v245
        %v602 = vunpack.c.l.b16 %v246
        %v603 = vunpack.c.h.b16 %v246
        %v604 = vunpack.c.l.b16 %v247
        %v605 = vunpack.c.h.b16 %v247
        %v606 = vunpack.c.l.b16 %v248
        %v607 = vunpack.c.h.b16 %v248
        %v608 = vunpack.c.l.b16 %v249
        %v609 = vunpack.c.h.b16 %v249
        %v610 = vunpack.c.l.b16 %v250
        %v611 = vunpack.c.h.b16 %v250
        %v612 = vunpack.c.l.b16 %v251
        %v613 = vunpack.c.h.b16 %v251
        %v614 = vunpack.c.l.b16 %v252
        %v615 = vunpack.c.h.b16 %v252
        %v616 = vunpack.c.l.b16 %v253
        %v617 = vunpack.c.h.b16 %v253
        %v618 = vunpack.c.l.b16 %v254
        %v619 = vunpack.c.h.b16 %v254
        %v620 = vunpack.c.l.b16 %v255
        %v621 = vunpack.c.h.b16 %v255
        %v622 = vunpack.c.l.b16 %v256
        %v623 = vunpack.c.h.b16 %v256
        %v624 = vunpack.c.l.b16 %v257
        %v625 = vunpack.c.h.b16 %v257
        %v626 = vunpack.c.l.b16 %v258
        %v627 = vunpack.c.h.b16 %v258
        %v628 = vunpack.c.l.b16 %v259
        %v629 = vunpack.c.h.b16 %v259
        %v630 = vunpack.c.l.b16 %v260
        %v631 = vunpack.c.h.b16 %v260
        %v632 = vunpack.c.l.b16 %v261
        %v633 = vunpack.c.h.b16 %v261
        %v634 = vunpack.c.l.b16 %v262
        %v635 = vunpack.c.h.b16 %v262
        %v636 = vunpack.c.l.b16 %v263
        %v637 = vunpack.c.h.b16 %v263
        %v638 = vunpack.c.l.b16 %v264
        %v639 = vunpack.c.h.b16 %v264
        %v640 = vunpack.c.l.b16 %v265
        %v641 = vunpack.c.h.b16 %v265
        %v642 = vunpack.c.l.b16 %v266
        %v643 = vunpack.c.h.b16 %v266
        %v644 = vunpack.c.l.b16 %v267
        %v645 = vunpack.c.h.b16 %v267
        %v646 = vunpack.c.l.b16 %v268
        %v647 = vunpack.c.h.b16 %v268
        %v648 = vunpack.c.l.b16 %v269
        %v649 = vunpack.c.h.b16 %v269
        %v650 = vunpack.c.l.b16 %v270
        %v651 = vunpack.c.h.b16 %v270
        %v652 = vunpack.c.l.b16 %v271
        %v653 = vunpack.c.h.b16 %v271
        %v654 = vunpack.c.l.b16 %v272
        %v655 = vunpack.c.h.b16 %v272
        %v656 = vunpack.c.l.b16 %v273
        %v657 = vunpack.c.h.b16 %v273
        %v658 = vunpack.c.l.b16 %v274
        %v659 = vunpack.c.h.b16 %v274
        %v660 = vunpack.c.l.b16 %v275
        %v661 = vunpack.c.h.b16 %v275
        %v662 = vunpack.c.l.b16 %v276
        %v663 = vunpack.c.h.b16 %v276
        %v664 = vunpack.c.l.b16 %v277
        %v665 = vunpack.c.h.b16 %v277
        %v666 = vunpack.c.l.b16 %v278
        %v667 = vunpack.c.h.b16 %v278
        %v668 = vunpack.c.l.b16 %v279
        %v669 = vunpack.c.h.b16 %v279
        %v670 = vunpack.c.l.b16 %v280
        %v671 = vunpack.c.h.b16 %v280
        %v672 = vunpack.c.l.b16 %v281
        %v673 = vunpack.c.h.b16 %v281
        %v674 = vunpack.c.l.b16 %v282
        %v675 = vunpack.c.h.b16 %v282
        %v676 = vunpack.c.l.b16 %v283
        %v677 = vunpack.c.h.b16 %v283
        %v678 = vunpack.c.l.b16 %v284
        %v679 = vunpack.c.h.b16 %v284
        %v680 = vunpack.c.l.b16 %v285
        %v681 = vunpack.c.h.b16 %v285
        %v682 = vunpack.c.l.b16 %v286
        %v683 = vunpack.c.h.b16 %v286
        %v684 = vunpack.c.l.b16 %v287
        %v685 = vunpack.c.h.b16 %v287
        %v686 = vunpack.c.l.b16 %v288
        %v687 = vunpack.c.h.b16 %v288
        %v688 = vunpack.c.l.b16 %v289
        %v689 = vunpack.c.h.b16 %v289
        %v690 = vunpack.c.l.b16 %v290
        %v691 = vunpack.c.h.b16 %v290
        %v692 = vunpack.c.l.b16 %v291
        %v693 = vunpack.c.h.b16 %v291
        %v694 = vunpack.c.l.b16 %v292
        %v695 = vunpack.c.h.b16 %v292
        %v696 = vunpack.c.l.b16 %v293
        %v697 = vunpack.c.h.b16 %v293
        %v698 = vunpack.c.l.b16 %v294
        %v699 = vunpack.c.h.b16 %v294
        %v700 = vunpack.c.l.b16 %v295
        %v701 = vunpack.c.h.b16 %v295
        %v702 = vunpack.c.l.b16 %v296
        %v703 = vunpack.c.h.b16 %v296
        %v704 = vunpack.c.l.b16 %v297
        %v705 = vunpack.c.h.b16 %v297
        %v706 = vunpack.c.l.b16 %v298
        %v707 = vunpack.c.h.b16 %v298
        %v708 = vunpack.c.l.b16 %v299
        %v709 = vunpack.c.h.b16 %v299
        %v710 = vunpack.c.l.b16 %v300
        %v711 = vunpack.c.h.b16 %v300
        %v712 = vunpack.c.l.b16 %v301
        %v713 = vunpack.c.h.b16 %v301
        %v714 = vunpack.c.l.b16 %v302
        %v715 = vunpack.c.h.b16 %v302
        %v716 = vunpack.c.l.b16 %v303
        %v717 = vunpack.c.h.b16 %v303
        %v718 = vunpack.c.l.b16 %v304
        %v719 = vunpack.c.h.b16 %v304
        %v720 = vunpack.c.l.b16 %v305
        %v721 = vunpack.c.h.b16 %v305
        %v722 = vunpack.c.l.b16 %v306
        %v723 = vunpack.c.h.b16 %v306
        %v724 = vunpack.c.l.b16 %v307
        %v725 = vunpack.c.h.b16 %v307
        %v726 = vunpack.c.l.b16 %v308
        %v727 = vunpack.c.h.b16 %v308
        %v728 = vunpack.c.l.b16 %v309
        %v729 = vunpack.c.h.b16 %v309
        %v730 = vunpack.c.l.b16 %v310
        %v731 = vunpack.c.h.b16 %v310
        %v732 = vunpack.c.l.b16 %v311
        %v733 = vunpack.c.h.b16 %v311
        %v734 = vunpack.c.l.b16 %v312
        %v735 = vunpack.c.h.b16 %v312
        %v736 = vunpack.c.l.b16 %v313
        %v737 = vunpack.c.h.b16 %v313
        %v738 = vpack.c.b16 %v486, %v482
        %v739 = vpack.c.b16 %v487, %v483
        %v740 = vpack.c.b16 %v488, %v484
        %v741 = vpack.c.b16 %v489, %v485
        %v742 = vpack.c.b16 %v494, %v490
        %v743 = vpack.c.b16 %v495, %v491
        %v744 = vpack.c.b16 %v496, %v492
        %v745 = vpack.c.b16 %v497, %v493
        %v746 = vpack.c.b16 %v502, %v498
        %v747 = vpack.c.b16 %v503, %v499
        %v748 = vpack.c.b16 %v504, %v500
        %v749 = vpack.c.b16 %v505, %v501
        %v750 = vpack.c.b16 %v510, %v506
        %v751 = vpack.c.b16 %v511, %v507
        %v752 = vpack.c.b16 %v512, %v508
        %v753 = vpack.c.b16 %v513, %v509
        %v754 = vpack.c.b16 %v518, %v514
        %v755 = vpack.c.b16 %v519, %v515
        %v756 = vpack.c.b16 %v520, %v516
        %v757 = vpack.c.b16 %v521, %v517
        %v758 = vpack.c.b16 %v526, %v522
        %v759 = vpack.c.b16 %v527, %v523
        %v760 = vpack.c.b16 %v528, %v524
        %v761 = vpack.c.b16 %v529, %v525
        %v762 = vpack.c.b16 %v534, %v530
        %v763 = vpack.c.b16 %v535, %v531
        %v764 = vpack.c.b16 %v536, %v532
        %v765 = vpack.c.b16 %v537, %v533
        %v766 = vpack.c.b16 %v542, %v538
        %v767 = vpack.c.b16 %v543, %v539
        %v768 = vpack.c.b16 %v544, %v540
        %v769 = vpack.c.b16 %v545, %v541
        %v770 = vpack.c.b16 %v550, %v546
        %v771 = vpack.c.b16 %v551, %v547
        %v772 = vpack.c.b16 %v552, %v548
        %v773 = vpack.c.b16 %v553, %v549
        %v774 = vpack.c.b16 %v558, %v554
        %v775 = vpack.c.b16 %v559, %v555
        %v776 = vpack.c.b16 %v560, %v556
        %v777 = vpack.c.b16 %v561, %v557
        %v778 = vpack.c.b16 %v566, %v562
        %v779 = vpack.c.b16 %v567, %v563
        %v780 = vpack.c.b16 %v568, %v564
        %v781 = vpack.c.b16 %v569, %v565
        %v782 = vpack.c.b16 %v574, %v570
        %v783 = vpack.c.b16 %v575, %v571
        %v784 = vpack.c.b16 %v576, %v572
        %v785 = vpack.c.b16 %v577, %v573
        %v786 = vpack.c.b16 %v582, %v578
        %v787 = vpack.c.b16 %v583, %v579
        %v788 = vpack.c.b16 %v584, %v580
        %v789 = vpack.c.b16 %v585, %v581
        %v790 = vpack.c.b16 %v590, %v586
        %v791 = vpack.c.b16 %v591, %v587
        %v792 = vpack.c.b16 %v592, %v588
        %v793 = vpack.c.b16 %v593, %v589
        %v794 = vpack.c.b16 %v598, %v594
        %v795 = vpack.c.b16 %v599, %v595
        %v796 = vpack.c.b16 %v600, %v596
        %v797 = vpack.c.b16 %v601, %v597
        %v798 = vpack.c.b16 %v606, %v602
        %v799 = vpack.c.b16 %v607, %v603
        %v800 = vpack.c.b16 %v608, %v604
        %v801 = vpack.c.b16 %v609, %v605
        %v802 = vpack.c.b16 %v614, %v610
        %v803 = vpack.c.b16 %v615, %v611
        %v804 = vpack.c.b16 %v616, %v612
        %v805 = vpack.c.b16 %v617, %v613
        %v806 = vpack.c.b16 %v622, %v618
        %v807 = vpack.c.b16 %v623, %v619
        %v808 = vpack.c.b16 %v624, %v620
        %v809 = vpack.c.b16 %v625, %v621
        %v810 = vpack.c.b16 %v630, %v626
        %v811 = vpack.c.b16 %v631, %v627
        %v812 = vpack.c.b16 %v632, %v628
        %v813 = vpack.c.b16 %v633, %v629
        %v814 = vpack.c.b16 %v638, %v634
        %v815 = vpack.c.b16 %v639, %v635
        %v816 = vpack.c.b16 %v640, %v636
        %v817 = vpack.c.b16 %v641, %v637
        %v818 = vpack.c.b16 %v646, %v642
        %v819 = vpack.c.b16 %v647, %v643
        %v820 = vpack.c.b16 %v648, %v644
        %v821 = vpack.c.b16 %v649, %v645
        %v822 = vpack.c.b16 %v654, %v650
        %v823 = vpack.c.b16 %v655, %v651
        %v824 = vpack.c.b16 %v656, %v652
        %v825 = vpack.c.b16 %v657, %v653
        %v826 = vpack.c.b16 %v662, %v658
        %v827 = vpack.c.b16 %v663, %v659
        %v828 = vpack.c.b16 %v664, %v660
        %v829 = vpack.c.b16 %v665, %v661
        %v830 = vpack.c.b16 %v670, %v666
        %v831 = vpack.c.b16 %v671, %v667
        %v832 = vpack.c.b16 %v672, %v668
        %v833 = vpack.c.b16 %v673, %v669
        %v834 = vpack.c.b16 %v678, %v674
        %v835 = vpack.c.b16 %v679, %v675
        %v836 = vpack.c.b16 %v680, %v676
        %v837 = vpack.c.b16 %v681, %v677
        %v838 = vpack.c.b16 %v686, %v682
        %v839 = vpack.c.b16 %v687, %v683
        %v840 = vpack.c.b16 %v688, %v684
        %v841 = vpack.c.b16 %v689, %v685
        %v842 = vpack.c.b16 %v694, %v690
        %v843 = vpack.c.b16 %v695, %v691
        %v844 = vpack.c.b16 %v696, %v692
        %v845 = vpack.c.b16 %v697, %v693
        %v846 = vpack.c.b16 %v702, %v698
        %v847 = vpack.c.b16 %v703, %v699
        %v848 = vpack.c.b16 %v704, %v700
        %v849 = vpack.c.b16 %v705, %v701
        %v850 = vpack.c.b16 %v710, %v706
        %v851 = vpack.c.b16 %v711, %v707
        %v852 = vpack.c.b16 %v712, %v708
        %v853 = vpack.c.b16 %v713, %v709
        %v854 = vpack.c.b16 %v718, %v714
        %v855 = vpack.c.b16 %v719, %v715
        %v856 = vpack.c.b16 %v720, %v716
        %v857 = vpack.c.b16 %v721, %v717
        %v858 = vpack.c.b16 %v726, %v722
        %v859 = vpack.c.b16 %v727, %v723
        %v860 = vpack.c.b16 %v728, %v724
        %v861 = vpack.c.b16 %v729, %v725
        %v862 = vpack.c.b16 %v734, %v730
        %v863 = vpack.c.b16 %v735, %v731
        %v864 = vpack.c.b16 %v736, %v732
        %v865 = vpack.c.b16 %v737, %v733
        %994 = vmatprep.subr.bf16.mxu0 %v739
        %995 = vmatpush1.bf16.msra.mxu0 %v738
        %996 = vmatprep.subr.bf16.mxu0 %v743
        %997 = vmatpush1.bf16.msra.mxu0 %v742
        %998 = vmatprep.subr.bf16.mxu0 %v747
        %999 = vmatpush1.bf16.msra.mxu0 %v746
        %1000 = vmatprep.subr.bf16.mxu0 %v751
        %1001 = vmatpush1.bf16.msra.mxu0 %v750
        %1002 = vmatprep.subr.bf16.mxu0 %v755
        %1003 = vmatpush1.bf16.msra.mxu0 %v754
        %1004 = vmatprep.subr.bf16.mxu0 %v759
        %1005 = vmatpush1.bf16.msra.mxu0 %v758
        %1006 = vmatprep.subr.bf16.mxu0 %v763
        %1007 = vmatpush1.bf16.msra.mxu0 %v762
        %1008 = vmatprep.subr.bf16.mxu0 %v767
        %1009 = vmatpush1.bf16.msra.mxu0 %v766
        %1010 = vmatprep.subr.bf16.mxu0 %v771
        %1011 = vmatpush1.bf16.msra.mxu0 %v770
        %1012 = vmatprep.subr.bf16.mxu0 %v775
        %1013 = vmatpush1.bf16.msra.mxu0 %v774
        %1014 = vmatprep.subr.bf16.mxu0 %v779
        %1015 = vmatpush1.bf16.msra.mxu0 %v778
        %1016 = vmatprep.subr.bf16.mxu0 %v783
        %1017 = vmatpush1.bf16.msra.mxu0 %v782
        %1018 = vmatprep.subr.bf16.mxu0 %v787
        %1019 = vmatpush1.bf16.msra.mxu0 %v786
        %1020 = vmatprep.subr.bf16.mxu0 %v791
        %1021 = vmatpush1.bf16.msra.mxu0 %v790
        %1022 = vmatprep.subr.bf16.mxu0 %v795
        %1023 = vmatpush1.bf16.msra.mxu0 %v794
        %1024 = vmatprep.subr.bf16.mxu0 %v799
        %1025 = vmatpush1.bf16.msra.mxu0 %v798
        %1026 = vmatprep.mubr.bf16.mxu0 %v339
        %1027 = vmatmul.mubr.bf16.gmra.mrb[0].mxu0 %v338
        %v1028 = vpop.f32.mrb[0].mxu0
        %v1029 = vadd.f32 0.0, %v1028
        %v1030 = vpop.f32.mrb[0].mxu0
        %v1031 = vadd.f32 0.0, %v1030
        %v1032 = vpop.f32.mrb[0].mxu0
        %v1033 = vadd.f32 0.0, %v1032
        %v1034 = vpop.f32.mrb[0].mxu0
        %v1035 = vadd.f32 0.0, %v1034
        %1036 = vmatprep.mubr.bf16.mxu0 %v343
        %1037 = vmatmul.mubr.bf16.gmra.mrb[0].mxu0 %v342
        %v1038 = vpop.f32.mrb[0].mxu0
        %v1039 = vadd.f32 0.0, %v1038
        %v1040 = vpop.f32.mrb[0].mxu0
        %v1041 = vadd.f32 0.0, %v1040
        %v1042 = vpop.f32.mrb[0].mxu0
        %v1043 = vadd.f32 0.0, %v1042
        %v1044 = vpop.f32.mrb[0].mxu0
        %v1045 = vadd.f32 0.0, %v1044
        %1046 = vdwg.mxu0
        %1047 = vmatprep.subr.bf16.mxu0 %v803
        %1048 = vmatpush1.bf16.msra.mxu0 %v802
        %1049 = vmatprep.subr.bf16.mxu0 %v807
        %1050 = vmatpush1.bf16.msra.mxu0 %v806
        %1051 = vmatprep.subr.bf16.mxu0 %v811
        %1052 = vmatpush1.bf16.msra.mxu0 %v810
        %1053 = vmatprep.subr.bf16.mxu0 %v815
        %1054 = vmatpush1.bf16.msra.mxu0 %v814
        %1055 = vmatprep.subr.bf16.mxu0 %v819
        %1056 = vmatpush1.bf16.msra.mxu0 %v818
        %1057 = vmatprep.subr.bf16.mxu0 %v823
        %1058 = vmatpush1.bf16.msra.mxu0 %v822
        %1059 = vmatprep.subr.bf16.mxu0 %v827
        %1060 = vmatpush1.bf16.msra.mxu0 %v826
        %1061 = vmatprep.subr.bf16.mxu0 %v831
        %1062 = vmatpush1.bf16.msra.mxu0 %v830
        %1063 = vmatprep.subr.bf16.mxu0 %v835
        %1064 = vmatpush1.bf16.msra.mxu0 %v834
        %1065 = vmatprep.subr.bf16.mxu0 %v839
        %1066 = vmatpush1.bf16.msra.mxu0 %v838
        %1067 = vmatprep.subr.bf16.mxu0 %v843
        %1068 = vmatpush1.bf16.msra.mxu0 %v842
        %1069 = vmatprep.subr.bf16.mxu0 %v847
        %1070 = vmatpush1.bf16.msra.mxu0 %v846
        %1071 = vmatprep.subr.bf16.mxu0 %v851
        %1072 = vmatpush1.bf16.msra.mxu0 %v850
        %1073 = vmatprep.subr.bf16.mxu0 %v855
        %1074 = vmatpush1.bf16.msra.mxu0 %v854
        %1075 = vmatprep.subr.bf16.mxu0 %v859
        %1076 = vmatpush1.bf16.msra.mxu0 %v858
        %1077 = vmatprep.subr.bf16.mxu0 %v863
        %1078 = vmatpush1.bf16.msra.mxu0 %v862
        %1079 = vmatprep.mubr.bf16.mxu0 %v341
        %1080 = vmatmul.mubr.bf16.gmra.mrb[0].mxu0 %v340
        %v1081 = vpop.f32.mrb[0].mxu0
        %v1082 = vadd.f32 %v1029, %v1081
        %v1083 = vpop.f32.mrb[0].mxu0
        %v1084 = vadd.f32 %v1031, %v1083
        %v1085 = vpop.f32.mrb[0].mxu0
        %v1086 = vadd.f32 %v1033, %v1085
        %v1087 = vpop.f32.mrb[0].mxu0
        %v1088 = vadd.f32 %v1035, %v1087
        %1089 = vmatprep.mubr.bf16.mxu0 %v345
        %1090 = vmatmul.mubr.bf16.gmra.mrb[0].mxu0 %v344
        %v1091 = vpop.f32.mrb[0].mxu0
        %v1092 = vadd.f32 %v1039, %v1091
        %v1093 = vpop.f32.mrb[0].mxu0
        %v1094 = vadd.f32 %v1041, %v1093
        %v1095 = vpop.f32.mrb[0].mxu0
        %v1096 = vadd.f32 %v1043, %v1095
        %v1097 = vpop.f32.mrb[0].mxu0
        %v1098 = vadd.f32 %v1045, %v1097
        %1099 = vdwg.mxu0
        %1100 = vmatprep.subr.bf16.mxu0 %v741
        %1101 = vmatpush1.bf16.msra.mxu0 %v740
        %1102 = vmatprep.subr.bf16.mxu0 %v745
        %1103 = vmatpush1.bf16.msra.mxu0 %v744
        %1104 = vmatprep.subr.bf16.mxu0 %v749
        %1105 = vmatpush1.bf16.msra.mxu0 %v748
        %1106 = vmatprep.subr.bf16.mxu0 %v753
        %1107 = vmatpush1.bf16.msra.mxu0 %v752
        %1108 = vmatprep.subr.bf16.mxu0 %v757
        %1109 = vmatpush1.bf16.msra.mxu0 %v756
        %1110 = vmatprep.subr.bf16.mxu0 %v761
        %1111 = vmatpush1.bf16.msra.mxu0 %v760
        %1112 = vmatprep.subr.bf16.mxu0 %v765
        %1113 = vmatpush1.bf16.msra.mxu0 %v764
        %1114 = vmatprep.subr.bf16.mxu0 %v769
        %1115 = vmatpush1.bf16.msra.mxu0 %v768
        %1116 = vmatprep.subr.bf16.mxu0 %v773
        %1117 = vmatpush1.bf16.msra.mxu0 %v772
        %1118 = vmatprep.subr.bf16.mxu0 %v777
        %1119 = vmatpush1.bf16.msra.mxu0 %v776
        %1120 = vmatprep.subr.bf16.mxu0 %v781
        %1121 = vmatpush1.bf16.msra.mxu0 %v780
        %1122 = vmatprep.subr.bf16.mxu0 %v785
        %1123 = vmatpush1.bf16.msra.mxu0 %v784
        %1124 = vmatprep.subr.bf16.mxu0 %v789
        %1125 = vmatpush1.bf16.msra.mxu0 %v788
        %1126 = vmatprep.subr.bf16.mxu0 %v793
        %1127 = vmatpush1.bf16.msra.mxu0 %v792
        %1128 = vmatprep.subr.bf16.mxu0 %v797
        %1129 = vmatpush1.bf16.msra.mxu0 %v796
        %1130 = vmatprep.subr.bf16.mxu0 %v801
        %1131 = vmatpush1.bf16.msra.mxu0 %v800
        %1132 = vmatprep.mubr.bf16.mxu0 %v339
        %1133 = vmatmul.mubr.bf16.gmra.mrb[0].mxu0 %v338
        %v1134 = vpop.f32.mrb[0].mxu0
        %v1135 = vadd.f32 0.0, %v1134
        %v1136 = vpop.f32.mrb[0].mxu0
        %v1137 = vadd.f32 0.0, %v1136
        %v1138 = vpop.f32.mrb[0].mxu0
        %v1139 = vadd.f32 0.0, %v1138
        %v1140 = vpop.f32.mrb[0].mxu0
        %v1141 = vadd.f32 0.0, %v1140
        %1142 = vmatprep.mubr.bf16.mxu0 %v343
        %1143 = vmatmul.mubr.bf16.gmra.mrb[0].mxu0 %v342
        %v1144 = vpop.f32.mrb[0].mxu0
        %v1145 = vadd.f32 0.0, %v1144
        %v1146 = vpop.f32.mrb[0].mxu0
        %v1147 = vadd.f32 0.0, %v1146
        %v1148 = vpop.f32.mrb[0].mxu0
        %v1149 = vadd.f32 0.0, %v1148
        %v1150 = vpop.f32.mrb[0].mxu0
        %v1151 = vadd.f32 0.0, %v1150
        %1152 = vdwg.mxu0
        %1153 = vmatprep.subr.bf16.mxu0 %v805
        %1154 = vmatpush1.bf16.msra.mxu0 %v804
        %1155 = vmatprep.subr.bf16.mxu0 %v809
        %1156 = vmatpush1.bf16.msra.mxu0 %v808
        %1157 = vmatprep.subr.bf16.mxu0 %v813
        %1158 = vmatpush1.bf16.msra.mxu0 %v812
        %1159 = vmatprep.subr.bf16.mxu0 %v817
        %1160 = vmatpush1.bf16.msra.mxu0 %v816
        %1161 = vmatprep.subr.bf16.mxu0 %v821
        %1162 = vmatpush1.bf16.msra.mxu0 %v820
        %1163 = vmatprep.subr.bf16.mxu0 %v825
        %1164 = vmatpush1.bf16.msra.mxu0 %v824
        %1165 = vmatprep.subr.bf16.mxu0 %v829
        %1166 = vmatpush1.bf16.msra.mxu0 %v828
        %1167 = vmatprep.subr.bf16.mxu0 %v833
        %1168 = vmatpush1.bf16.msra.mxu0 %v832
        %1169 = vmatprep.subr.bf16.mxu0 %v837
        %1170 = vmatpush1.bf16.msra.mxu0 %v836
        %1171 = vmatprep.subr.bf16.mxu0 %v841
        %1172 = vmatpush1.bf16.msra.mxu0 %v840
        %1173 = vmatprep.subr.bf16.mxu0 %v845
        %1174 = vmatpush1.bf16.msra.mxu0 %v844
        %1175 = vmatprep.subr.bf16.mxu0 %v849
        %1176 = vmatpush1.bf16.msra.mxu0 %v848
        %1177 = vmatprep.subr.bf16.mxu0 %v853
        %1178 = vmatpush1.bf16.msra.mxu0 %v852
        %1179 = vmatprep.subr.bf16.mxu0 %v857
        %1180 = vmatpush1.bf16.msra.mxu0 %v856
        %1181 = vmatprep.subr.bf16.mxu0 %v861
        %1182 = vmatpush1.bf16.msra.mxu0 %v860
        %1183 = vmatprep.subr.bf16.mxu0 %v865
        %1184 = vmatpush1.bf16.msra.mxu0 %v864
        %1185 = vmatprep.mubr.bf16.mxu0 %v341
        %1186 = vmatmul.mubr.bf16.gmra.mrb[0].mxu0 %v340
        %v1187 = vpop.f32.mrb[0].mxu0
        %v1188 = vadd.f32 %v1135, %v1187
        %v1189 = vpop.f32.mrb[0].mxu0
        %v1190 = vadd.f32 %v1137, %v1189
        %v1191 = vpop.f32.mrb[0].mxu0
        %v1192 = vadd.f32 %v1139, %v1191
        %v1193 = vpop.f32.mrb[0].mxu0
        %v1194 = vadd.f32 %v1141, %v1193
        %1195 = vmatprep.mubr.bf16.mxu0 %v345
        %1196 = vmatmul.mubr.bf16.gmra.mrb[0].mxu0 %v344
        %v1197 = vpop.f32.mrb[0].mxu0
        %v1198 = vadd.f32 %v1145, %v1197
        %v1199 = vpop.f32.mrb[0].mxu0
        %v1200 = vadd.f32 %v1147, %v1199
        %v1201 = vpop.f32.mrb[0].mxu0
        %v1202 = vadd.f32 %v1149, %v1201
        %v1203 = vpop.f32.mrb[0].mxu0
        %v1204 = vadd.f32 %v1151, %v1203
        %1205 = vdwg.mxu0
        %v1206 = vmul.f32 %v1082, %v1082
        %v1207 = vmul.f32 %v1084, %v1084
        %v1208 = vmul.f32 %v1086, %v1086
        %v1209 = vmul.f32 %v1088, %v1088
        %v1210 = vmul.f32 %v1188, %v1188
        %v1211 = vmul.f32 %v1190, %v1190
        %v1212 = vmul.f32 %v1192, %v1192
        %v1213 = vmul.f32 %v1194, %v1194
        %v1214 = vadd.f32 %v1206, %v1210
        %v1215 = vadd.f32 %v1207, %v1211
        %v1216 = vadd.f32 %v1208, %v1212
        %v1217 = vadd.f32 %v1209, %v1213
        %v1218 = vmax.f32 %v1214, 1e-16
        %v1219 = vmax.f32 %v1215, 1e-16
        %v1220 = vmax.f32 %v1216, 1e-16
        %v1221 = vmax.f32 %v1217, 1e-16
        %v1222 = vlog2.pop %v1218
        %v1223 = vmul.f32 %v1222, 0.6931472
        %v1224 = vlog2.pop %v1219
        %v1225 = vmul.f32 %v1224, 0.6931472
        %v1226 = vlog2.pop %v1220
        %v1227 = vmul.f32 %v1226, 0.6931472
        %v1228 = vlog2.pop %v1221
        %v1229 = vmul.f32 %v1228, 0.6931472
        %v1230 = vmul.f32 %v1092, %v1092
        %v1231 = vmul.f32 %v1094, %v1094
        %v1232 = vmul.f32 %v1096, %v1096
        %v1233 = vmul.f32 %v1098, %v1098
        %v1234 = vmul.f32 %v1198, %v1198
        %v1235 = vmul.f32 %v1200, %v1200
        %v1236 = vmul.f32 %v1202, %v1202
        %v1237 = vmul.f32 %v1204, %v1204
        %v1238 = vadd.f32 %v1230, %v1234
        %v1239 = vadd.f32 %v1231, %v1235
        %v1240 = vadd.f32 %v1232, %v1236
        %v1241 = vadd.f32 %v1233, %v1237
        %v1242 = vmax.f32 %v1238, 1e-16
        %v1243 = vmax.f32 %v1239, 1e-16
        %v1244 = vmax.f32 %v1240, 1e-16
        %v1245 = vmax.f32 %v1241, 1e-16
        %v1246 = vlog2.pop %v1242
        %v1247 = vmul.f32 %v1246, 0.6931472
        %v1248 = vlog2.pop %v1243
        %v1249 = vmul.f32 %v1248, 0.6931472
        %v1250 = vlog2.pop %v1244
        %v1251 = vmul.f32 %v1250, 0.6931472
        %v1252 = vlog2.pop %v1245
        %v1253 = vmul.f32 %v1252, 0.6931472
        %v1254 = vmul.f32 %v1223, 0.35
        %v1255 = vmul.f32 %v1225, 0.35
        %v1256 = vmul.f32 %v1227, 0.35
        %v1257 = vmul.f32 %v1229, 0.35
        %v1258 = vmul.f32 %v1254, 1.442695
        %v1259 = vpow.pop %v1258
        %v1260 = vmul.f32 %v1255, 1.442695
        %v1261 = vpow.pop %v1260
        %v1262 = vmul.f32 %v1256, 1.442695
        %v1263 = vpow.pop %v1262
        %v1264 = vmul.f32 %v1257, 1.442695
        %v1265 = vpow.pop %v1264
        %v1266 = vmul.f32 %v1247, 0.35
        %v1267 = vmul.f32 %v1249, 0.35
        %v1268 = vmul.f32 %v1251, 0.35
        %v1269 = vmul.f32 %v1253, 0.35
        %v1270 = vmul.f32 %v1266, 1.442695
        %v1271 = vpow.pop %v1270
        %v1272 = vmul.f32 %v1267, 1.442695
        %v1273 = vpow.pop %v1272
        %v1274 = vmul.f32 %v1268, 1.442695
        %v1275 = vpow.pop %v1274
        %v1276 = vmul.f32 %v1269, 1.442695
        %v1277 = vpow.pop %v1276
        %v1278 = vrcp.pop %v1259
        %v1279 = vrcp.pop %v1261
        %v1280 = vrcp.pop %v1263
        %v1281 = vrcp.pop %v1265
        %v1282 = vrcp.pop %v1271
        %v1283 = vrcp.pop %v1273
        %v1284 = vrcp.pop %v1275
        %v1285 = vrcp.pop %v1277
        %v1286 = vsub.f32 %v1259, %v1271
        %v1287 = vsub.f32 %v1261, %v1273
        %v1288 = vsub.f32 %v1263, %v1275
        %v1289 = vsub.f32 %v1265, %v1277
        %v1290 = vmul.f32 %v1082, %v1278
        %v1291 = vmul.f32 %v1084, %v1279
        %v1292 = vmul.f32 %v1086, %v1280
        %v1293 = vmul.f32 %v1088, %v1281
        %v1294 = vmul.f32 %v1092, %v1282
        %v1295 = vmul.f32 %v1094, %v1283
        %v1296 = vmul.f32 %v1096, %v1284
        %v1297 = vmul.f32 %v1098, %v1285
        %v1298 = vsub.f32 %v1290, %v1294
        %v1299 = vsub.f32 %v1291, %v1295
        %v1300 = vsub.f32 %v1292, %v1296
        %v1301 = vsub.f32 %v1293, %v1297
        %v1302 = vmul.f32 %v1188, %v1278
        %v1303 = vmul.f32 %v1190, %v1279
        %v1304 = vmul.f32 %v1192, %v1280
        %v1305 = vmul.f32 %v1194, %v1281
        %v1306 = vmul.f32 %v1198, %v1282
        %v1307 = vmul.f32 %v1200, %v1283
        %v1308 = vmul.f32 %v1202, %v1284
        %v1309 = vmul.f32 %v1204, %v1285
        %v1310 = vsub.f32 %v1302, %v1306
        %v1311 = vsub.f32 %v1303, %v1307
        %v1312 = vsub.f32 %v1304, %v1308
        %v1313 = vsub.f32 %v1305, %v1309
        %v1314 = vmul.f32 %v1286, %v1286
        %v1315 = vmul.f32 %v1287, %v1287
        %v1316 = vmul.f32 %v1288, %v1288
        %v1317 = vmul.f32 %v1289, %v1289
        %v1318 = vadd.f32 %v1314, %v1316
        %v1319 = vrot.slane %v1318, 4
        %v1320 = vadd.f32 %v1318, %v1319
        %v1321 = vrot.slane %v1320, 2
        %v1322 = vadd.f32 %v1320, %v1321
        %v1323 = vrot.slane %v1322, 1
        %v1324 = vadd.f32 %v1322, %v1323
        %v1325 = vadd.f32 %v1315, %v1317
        %v1326 = vrot.slane %v1325, 4
        %v1327 = vadd.f32 %v1325, %v1326
        %v1328 = vrot.slane %v1327, 2
        %v1329 = vadd.f32 %v1327, %v1328
        %v1330 = vrot.slane %v1329, 1
        %v1331 = vadd.f32 %v1329, %v1330
        %v1332 = vmul.f32 %v1298, %v1298
        %v1333 = vmul.f32 %v1299, %v1299
        %v1334 = vmul.f32 %v1300, %v1300
        %v1335 = vmul.f32 %v1301, %v1301
        %v1336 = vmul.f32 %v1310, %v1310
        %v1337 = vmul.f32 %v1311, %v1311
        %v1338 = vmul.f32 %v1312, %v1312
        %v1339 = vmul.f32 %v1313, %v1313
        %v1340 = vadd.f32 %v1332, %v1336
        %v1341 = vadd.f32 %v1333, %v1337
        %v1342 = vadd.f32 %v1334, %v1338
        %v1343 = vadd.f32 %v1335, %v1339
        %v1344 = vadd.f32 %v1340, %v1342
        %v1345 = vrot.slane %v1344, 4
        %v1346 = vadd.f32 %v1344, %v1345
        %v1347 = vrot.slane %v1346, 2
        %v1348 = vadd.f32 %v1346, %v1347
        %v1349 = vrot.slane %v1348, 1
        %v1350 = vadd.f32 %v1348, %v1349
        %v1351 = vadd.f32 %v1341, %v1343
        %v1352 = vrot.slane %v1351, 4
        %v1353 = vadd.f32 %v1351, %v1352
        %v1354 = vrot.slane %v1353, 2
        %v1355 = vadd.f32 %v1353, %v1354
        %v1356 = vrot.slane %v1355, 1
        %v1357 = vadd.f32 %v1355, %v1356
        %v1358 = vmul.f32 %v1324, 70.0
        %v1359 = vmul.f32 %v1331, 70.0
        %v1360 = vmul.f32 %v1350, 30.0
        %v1361 = vmul.f32 %v1357, 30.0
        %v1362 = vadd.f32 %v1358, %v1360
        %v1363 = vadd.f32 %v1359, %v1361
        %v1366 = vcombine.low %v1362, %v1363
        %v1368 = vunpack.c.l.s4 1966171168
        %v1369 = vunpack.c.0.s8 %v1368
        %v1370 = vlaneseq
        %v1371 = vshrl.u32 %v1370, 7
        %v1372 = vsub.s32 %v1369, %v1371
        %v1373 = vrot.slane %v1366, %v1372
        %v1375 = vunpack.c.l.s4 1966171168
        %v1376 = vunpack.c.0.s8 %v1375
        %v1377 = vlaneseq
        %v1378 = vshrl.u32 %v1377, 7
        %v1379 = vsub.s32 %v1376, %v1378
        %v1380 = vrot.slane %v1373, %v1379
        %v1382 = vlaneseq
        %vm1383 = vcmp.ge.s32.totalorder %v1382, 0
        %vm1384 = vcmp.lt.s32.totalorder %v1382, 256
        %vm1385 = vmand %vm1383, %vm1384
        %1386 = vst.msk [vmem:[%s177] sm:$0x3] %vm1385, %v1380
        %p1387 = scmp.lt.s32.totalorder %s13, 1
        %s1388 = scalar_select %p1387, %s13, 1
        %s1389 = smul.addr %s1388, 2
        %s1390 = scalar_lea.vmem %s2, %s1389
        // Predicated region
        $region52: #{loss_stft_pallas.1} parent=46 // pred_check
          %p1391 = pneg %p78
        $region53: #{loss_stft_pallas.1} parent=46 // pred_check_branch
          %1393 = sbr.rel (%p1391) target = $region55
        $region54: #{loss_stft_pallas.1} parent=46 // pred_region
          _
        $region55: #{loss_stft_pallas.1} parent=46 // pred_fallthru
          _
      $region47: #{loss_stft_pallas.1} parent=5 // pred_fallthru
        _
      %p1394 = scmp.le.s32.totalorder 2, %s8
      // Predicated region
      $region56: #{loss_stft_pallas.1} parent=5 // pred_check
        %p1395 = pneg %p1394
      $region57: #{loss_stft_pallas.1} parent=5 // pred_check_branch
        %1397 = sbr.rel (%p1395) target = $region59
      $region58: #{loss_stft_pallas.1} parent=5 // pred_region
        %s1398 = ssub.s32 %s8, 2
        // Predicated region
        $region60: #{loss_stft_pallas.1} parent=58 // pred_check
          %p1399 = pneg %p84
        $region61: #{loss_stft_pallas.1} parent=58 // pred_check_branch
          %1401 = sbr.rel (%p1399) target = $region63
        $region62: #{loss_stft_pallas.1} parent=58 // pred_region
          %p1402 = scmp.lt.s32.totalorder %s14, 1
          %s1403 = scalar_select %p1402, %s14, 1
          %s1404 = smul.addr %s1403, 2
          %s1405 = scalar_lea.vmem %s2, %s1404
        $region63: #{loss_stft_pallas.1} parent=58 // pred_fallthru
          _
      $region59: #{loss_stft_pallas.1} parent=5 // pred_fallthru
        _
    $region6: #{loss_stft_pallas.1} parent=1 // loop_footer
      %s12 = sadd.s32 1, %s8
    $region7: #{loss_stft_pallas.1} parent=1 // loop_footer_branch
      %7 = sbr.rel target = $region3
    $region8: #{loss_stft_pallas.1} parent=1 // loop_exit
      _

</llo_original>
